<compile_context>
chip_gen: v7x
topology: tpu7x:2x2x1
jax: 0.10.0
libtpu: 0.0.40
codegen_flags: <defaults>
</compile_context>

<pallas_src>
import math
import functools

import jax
import jax.numpy as jnp
from jax import lax
from jax.experimental import pallas as pl
from jax.experimental.pallas import tpu as pltpu


# ---------------------------------------------------------------------------
# Pass A: router MLP + softmax + top-k statistics (token-tiled, accumulating)
# ---------------------------------------------------------------------------
def _router_probs_kernel(x_ref, w1_ref, b1_ref, w2_ref, b2_ref, mask_ref,
                         probs_ref, chosen_ref, aux_ref,
                         psum_acc,
                         *, top_k, num_experts, n_tokens, balance_coefficient):
    t = pl.program_id(0)
    E = num_experts

    @pl.when(t == 0)
    def _init():
        chosen_ref[...] = jnp.zeros_like(chosen_ref)
        aux_ref[...] = jnp.zeros_like(aux_ref)
        psum_acc[...] = jnp.zeros_like(psum_acc)

    # --- router MLP: Linear -> ReLU -> Linear (MXU, native input dtype) ---
    x = x_ref[...]
    h = jnp.dot(x, w1_ref[...], preferred_element_type=jnp.float32)
    h = jnp.maximum(h + b1_ref[...].astype(jnp.float32), 0.0)
    h = h.astype(w2_ref.dtype)
    logits = jnp.dot(h, w2_ref[...], preferred_element_type=jnp.float32)
    logits = logits + b2_ref[...].astype(jnp.float32)
    logits = logits + (1.0 - mask_ref[...].astype(jnp.float32)) * (-1e9)

    # --- softmax over experts ---
    mx = jnp.max(logits, axis=-1, keepdims=True)
    ex = jnp.exp(logits - mx)
    probs = ex * pl.reciprocal(jnp.sum(ex, axis=-1, keepdims=True))   # [TN, E]
    probs_ref[...] = probs.astype(probs_ref.dtype)

    # accumulate per-expert prob sum for the aux loss
    psum_acc[...] += jnp.sum(probs, axis=0, keepdims=True)

    # --- per-slot "expert chosen by at least one token in this tile" ---
    TN = probs.shape[0]
    e_iota = lax.broadcasted_iota(jnp.int32, (TN, E), 1)
    slot_iota = lax.broadcasted_iota(jnp.int32, (top_k, 1), 0)
    chosen_tile = jnp.zeros((top_k, E), jnp.float32)
    work = probs
    for i in range(top_k):
        m = jnp.max(work, axis=-1, keepdims=True)
        idx = jnp.min(jnp.where(work == m, e_iota, E), axis=-1, keepdims=True)
        oh = (e_iota == idx)
        row = jnp.max(oh.astype(jnp.float32), axis=0, keepdims=True)    # [1, E]
        chosen_tile = chosen_tile + jnp.where(slot_iota == i, row, 0.0)
        work = jnp.where(oh, -jnp.inf, work)
    chosen_ref[...] = jnp.maximum(chosen_ref[...], chosen_tile)

    # --- auxiliary (load-balancing) loss, finalized on the last tile ---
    @pl.when(t == pl.num_programs(0) - 1)
    def _finalize():
        p_per_e = psum_acc[...] * (1.0 / n_tokens)                      # [1, E]
        aux = jnp.sum(p_per_e * jnp.log(p_per_e * E + 1e-9),
                      axis=-1, keepdims=True)
        entropy = -jnp.sum(p_per_e * jnp.log(p_per_e + 1e-9),
                           axis=-1, keepdims=True)
        # balance_mode == 'entropy'
        aux_ref[...] = aux - balance_coefficient * (entropy / math.log(E))


# ---------------------------------------------------------------------------
# Pass B: dispatch/combine construction (token-parallel, lane-dense stores)
# ---------------------------------------------------------------------------
def _dispatch_kernel(probs_ref, b_ref, disp_ref, comb_ref,
                     *, top_k, num_experts):
    E = num_experts
    probs = probs_ref[...].astype(jnp.float32)                          # [TN, E]
    TN = probs.shape[0]
    e_iota = lax.broadcasted_iota(jnp.int32, (TN, E), 1)

    # cheap per-tile top-k (E is small); identical tie-breaking to pass A
    work = probs
    ohs, ps = [], []
    for _ in range(top_k):
        m = jnp.max(work, axis=-1, keepdims=True)
        idx = jnp.min(jnp.where(work == m, e_iota, E), axis=-1, keepdims=True)
        oh = (e_iota == idx)
        ohs.append(oh.astype(jnp.float32))
        ps.append(m)
        work = jnp.where(oh, -jnp.inf, work)
    psum = ps[0]
    for p in ps[1:]:
        psum = psum + p
    inv = pl.reciprocal(psum, approx=True)          # EUP slot; renormalization

    # scatter via small MXU matmuls: [TN,E] @ [E, E*cap] -> lane-dense [TN,E*cap]
    acc_d = None
    acc_c = None
    for i in range(top_k):
        b_i = b_ref[i * E:(i + 1) * E, :]                               # [E, E*cap]
        d_i = jnp.dot(ohs[i], b_i, preferred_element_type=jnp.float32)
        c_i = jnp.dot(ohs[i] * (ps[i] * inv), b_i,
                      preferred_element_type=jnp.float32)
        acc_d = d_i if acc_d is None else acc_d + d_i
        acc_c = c_i if acc_c is None else acc_c + c_i
    disp_ref[...] = acc_d.astype(disp_ref.dtype)
    comb_ref[...] = acc_c.astype(comb_ref.dtype)


# ---------------------------------------------------------------------------
# Wrapper
# ---------------------------------------------------------------------------
def _pick_token_tile(n_tokens, bytes_per_token, budget_bytes=12 * 1024 * 1024):
    """Largest token tile that divides n_tokens, is a multiple of 8 (or == n),
    and keeps the double-buffered streaming footprint under budget (safe for
    v7x's 64 MiB VMEM as well as v5e/v6e)."""
    if n_tokens * bytes_per_token <= budget_bytes:
        return n_tokens
    for cand in (4096, 2048, 1024, 512, 256, 128, 64, 32, 16, 8):
        if n_tokens % cand == 0 and cand * bytes_per_token <= budget_bytes:
            return cand
    for cand in (8, 16, 32, 64, 128):
        if n_tokens % cand == 0:
            return cand
    return n_tokens


def topk_balanced_router(hidden_states, w1, b1, w2, b2, expert_mask=None, *,
                         num_experts, top_k=2, capacity_factor=1.5,
                         balance_coefficient=0.01):
    B, S, H = hidden_states.shape
    N = B * S
    E = num_experts
    k = min(top_k, num_experts)
    capacity = int(B * S * capacity_factor * k / E)

    x2 = hidden_states.reshape(N, H)                 # keep native dtype (bf16 ok)
    b1r = b1.reshape(1, H)
    b2r = b2.reshape(1, E)
    if expert_mask is None:
        mask = jnp.ones((1, E), jnp.float32)
    else:
        mask = expert_mask.reshape(1, E).astype(jnp.float32)

    # ------------------------- pass A -------------------------
    bytes_per_tok_a = 2 * (H * x2.dtype.itemsize + E * 4)
    tn_a = _pick_token_tile(N, bytes_per_tok_a)
    probs, chosen, aux = pl.pallas_call(
        functools.partial(_router_probs_kernel, top_k=k, num_experts=E,
                          n_tokens=N, balance_coefficient=balance_coefficient),
        out_shape=(
            jax.ShapeDtypeStruct((N, E), jnp.float32),    # router probs
            jax.ShapeDtypeStruct((k, E), jnp.float32),    # per-slot chosen mask
            jax.ShapeDtypeStruct((1, 1), jnp.float32),    # aux loss
        ),
        grid=(N // tn_a,),
        in_specs=[
            pl.BlockSpec((tn_a, H), lambda t: (t, 0)),
            pl.BlockSpec((H, H), lambda t: (0, 0)),
            pl.BlockSpec((1, H), lambda t: (0, 0)),
            pl.BlockSpec((H, E), lambda t: (0, 0)),
            pl.BlockSpec((1, E), lambda t: (0, 0)),
            pl.BlockSpec((1, E), lambda t: (0, 0)),
        ],
        out_specs=(
            pl.BlockSpec((tn_a, E), lambda t: (t, 0)),
            pl.BlockSpec((k, E), lambda t: (0, 0)),
            pl.BlockSpec((1, 1), lambda t: (0, 0)),
        ),
        scratch_shapes=[pltpu.VMEM((1, E), jnp.float32)],
        compiler_params=pltpu.CompilerParams(
            dimension_semantics=("arbitrary",),            # accumulators
            vmem_limit_bytes=64 * 1024 * 1024),
    )(x2, w1, b1r, w2, b2r, mask)

    router_probs = probs.reshape(B, S, E).astype(hidden_states.dtype)
    aux_loss = aux[0, 0]

    if capacity <= 0:
        # Degenerate capacity (same zero-width result as the reference).
        z = jnp.zeros((B, S, E, capacity), jnp.float32)
        return z, z, router_probs, aux_loss

    # --- tiny glue ([k,E] scalars): replay the PyTorch expert_count recursion
    #     (non-accumulating scatter => at most +1 per expert per slot) and bake
    #     the resulting global capacity positions into a scatter matrix. ---
    chosen_b = chosen > 0.5                                   # [k, E]
    cnt = jnp.zeros((E,), jnp.int32)
    pos_rows = []
    for i in range(k):
        valid = cnt < capacity
        pos_rows.append(jnp.where(valid, cnt, capacity))      # sentinel >= capacity
        cnt = cnt + (chosen_b[i] & valid).astype(jnp.int32)
    pos_eff = jnp.stack(pos_rows).astype(jnp.int32)           # [k, E]

    col_e = jnp.repeat(jnp.arange(E, dtype=jnp.int32), capacity)   # [E*cap]
    col_c = jnp.tile(jnp.arange(capacity, dtype=jnp.int32), E)     # [E*cap]
    row_e = jnp.arange(E, dtype=jnp.int32)
    bmat = ((col_e[None, None, :] == row_e[None, :, None]) &
            (col_c[None, None, :] == pos_eff[:, :, None])).astype(jnp.float32)
    bmat = bmat.reshape(k * E, E * capacity)                  # [k*E, E*cap]

    # ------------------------- pass B -------------------------
    ec = E * capacity
    bytes_per_tok_b = 16 * ec + 8 * E
    tn_b = _pick_token_tile(N, bytes_per_tok_b)
    disp, comb = pl.pallas_call(
        functools.partial(_dispatch_kernel, top_k=k, num_experts=E),
        out_shape=(
            jax.ShapeDtypeStruct((N, ec), jnp.float32),       # dispatch (flat)
            jax.ShapeDtypeStruct((N, ec), jnp.float32),       # combine  (flat)
        ),
        grid=(N // tn_b,),
        in_specs=[
            pl.BlockSpec((tn_b, E), lambda t: (t, 0)),
            pl.BlockSpec((k * E, ec), lambda t: (0, 0)),
        ],
        out_specs=(
            pl.BlockSpec((tn_b, ec), lambda t: (t, 0)),
            pl.BlockSpec((tn_b, ec), lambda t: (t, 0)),
        ),
        compiler_params=pltpu.CompilerParams(
            dimension_semantics=("parallel",),                # megacore on v7x
            vmem_limit_bytes=64 * 1024 * 1024),
    )(probs, bmat)

    dispatch_tensor = disp.reshape(B, S, E, capacity)
    combine_tensor = comb.reshape(B, S, E, capacity)
    return dispatch_tensor, combine_tensor, router_probs, aux_loss


if __name__ == "__main__":
    # small deterministic setup
    B, S, H, E = 2, 8, 32, 8
    key = jax.random.PRNGKey(0)
    kx, k1, kb1, k2, kb2 = jax.random.split(key, 5)

    hidden_states = jax.random.normal(kx, (B, S, H), dtype=jnp.float32)

    # deterministic "Linear" parameter init (uniform, like torch default scale)
    bound1 = 1.0 / math.sqrt(H)
    w1 = jax.random.uniform(k1, (H, H), minval=-bound1, maxval=bound1, dtype=jnp.float32)
    b1 = jax.random.uniform(kb1, (H,), minval=-bound1, maxval=bound1, dtype=jnp.float32)
    w2 = jax.random.uniform(k2, (H, E), minval=-bound1, maxval=bound1, dtype=jnp.float32)
    b2 = jax.random.uniform(kb2, (E,), minval=-bound1, maxval=bound1, dtype=jnp.float32)

    dispatch_tensor, combine_tensor, router_probs, aux_loss = topk_balanced_router(
        hidden_states, w1, b1, w2, b2, expert_mask=None,
        num_experts=E, top_k=2, capacity_factor=1.5, balance_coefficient=0.01)

    jax.block_until_ready((dispatch_tensor, combine_tensor, router_probs, aux_loss))
    print("KERNEL_OK")
</pallas_src>

<mosaic_0001>
module attributes {stable_mosaic.version = 11 : i64} {
  func.func @_router_probs_kernel(%arg0: i32, %arg1: memref<16x32xf32, #tpu.memory_space<vmem>>, %arg2: memref<32x32xf32, #tpu.memory_space<vmem>>, %arg3: memref<1x32xf32, #tpu.memory_space<vmem>>, %arg4: memref<32x8xf32, #tpu.memory_space<vmem>>, %arg5: memref<1x8xf32, #tpu.memory_space<vmem>>, %arg6: memref<1x8xf32, #tpu.memory_space<vmem>>, %arg7: memref<16x8xf32, #tpu.memory_space<vmem>>, %arg8: memref<2x8xf32, #tpu.memory_space<vmem>>, %arg9: memref<1x1xf32, #tpu.memory_space<vmem>>, %arg10: memref<1x8xf32, #tpu.memory_space<vmem>>) attributes {dimension_semantics = [#tpu.dimension_semantics<arbitrary>], iteration_bounds = array<i64: 1>, scalar_prefetch = 0 : i64, scratch_operands = 1 : i64, tpu.core_type = #tpu.core_type<tc>, window_params = [{transform_indices = @transform_0, window_bounds = array<i64: 16, 32>}, {pipeline_mode = #tpu.pipeline_mode<synchronous>, transform_indices = @transform_1, window_bounds = array<i64: 32, 32>}, {pipeline_mode = #tpu.pipeline_mode<synchronous>, transform_indices = @transform_2, window_bounds = array<i64: 1, 32>}, {pipeline_mode = #tpu.pipeline_mode<synchronous>, transform_indices = @transform_3, window_bounds = array<i64: 32, 8>}, {pipeline_mode = #tpu.pipeline_mode<synchronous>, transform_indices = @transform_4, window_bounds = array<i64: 1, 8>}, {pipeline_mode = #tpu.pipeline_mode<synchronous>, transform_indices = @transform_5, window_bounds = array<i64: 1, 8>}, {transform_indices = @transform_6, window_bounds = array<i64: 16, 8>}, {pipeline_mode = #tpu.pipeline_mode<synchronous>, transform_indices = @transform_7, window_bounds = array<i64: 2, 8>}, {pipeline_mode = #tpu.pipeline_mode<synchronous>, transform_indices = @transform_8, window_bounds = array<i64: 1, 1>}]} {
    %c0_i32 = arith.constant 0 : i32
    %0 = arith.cmpi eq, %arg0, %c0_i32 : i32
    %1 = arith.extui %0 : i1 to i32
    %c0_i32_0 = arith.constant 0 : i32
    %2 = arith.cmpi ne, %1, %c0_i32_0 : i32
    scf.if %2 {
      %cst_43 = arith.constant 0.000000e+00 : f32
      %96 = vector.broadcast %cst_43 : f32 to vector<2x8xf32>
      %c0_44 = arith.constant 0 : index
      %c0_45 = arith.constant 0 : index
      %97 = vector.load %arg8[%c0_44, %c0_45] : memref<2x8xf32, #tpu.memory_space<vmem>>, vector<2x8xf32>
      tpu.vector_store %arg8[%c0_44, %c0_45], %96 {strides = array<i32>} : memref<2x8xf32, #tpu.memory_space<vmem>>, vector<2x8xf32>,
      %cst_46 = arith.constant 0.000000e+00 : f32
      %98 = vector.broadcast %cst_46 : f32 to vector<1x1xf32>
      %c0_47 = arith.constant 0 : index
      %c0_48 = arith.constant 0 : index
      %99 = vector.load %arg9[%c0_47, %c0_48] : memref<1x1xf32, #tpu.memory_space<vmem>>, vector<1x1xf32>
      tpu.vector_store %arg9[%c0_47, %c0_48], %98 {strides = array<i32>} : memref<1x1xf32, #tpu.memory_space<vmem>>, vector<1x1xf32>,
      %cst_49 = arith.constant 0.000000e+00 : f32
      %100 = vector.broadcast %cst_49 : f32 to vector<1x8xf32>
      %c0_50 = arith.constant 0 : index
      %c0_51 = arith.constant 0 : index
      %101 = vector.load %arg10[%c0_50, %c0_51] : memref<1x8xf32, #tpu.memory_space<vmem>>, vector<1x8xf32>
      tpu.vector_store %arg10[%c0_50, %c0_51], %100 {strides = array<i32>} : memref<1x8xf32, #tpu.memory_space<vmem>>, vector<1x8xf32>,
    } else {
    }
    %c0 = arith.constant 0 : index
    %c0_1 = arith.constant 0 : index
    %3 = vector.load %arg1[%c0, %c0_1] : memref<16x32xf32, #tpu.memory_space<vmem>>, vector<16x32xf32>
    %c0_2 = arith.constant 0 : index
    %c0_3 = arith.constant 0 : index
    %4 = vector.load %arg2[%c0_2, %c0_3] : memref<32x32xf32, #tpu.memory_space<vmem>>, vector<32x32xf32>
    %cst = arith.constant dense<0.000000e+00> : vector<16x32xf32>
    %5 = tpu.matmul %3, %4, %cst {dimension_numbers = #tpu.dot_dimension_numbers<[1], [0], [0], [1], [0, 0, 1, 1], [], []>} : vector<16x32xf32>, vector<32x32xf32>, vector<16x32xf32> -> vector<16x32xf32>
    %c0_4 = arith.constant 0 : index
    %c0_5 = arith.constant 0 : index
    %6 = vector.load %arg3[%c0_4, %c0_5] : memref<1x32xf32, #tpu.memory_space<vmem>>, vector<1x32xf32>
    %7 = vector.broadcast %6 : vector<1x32xf32> to vector<16x32xf32>
    %8 = arith.addf %5, %7 : vector<16x32xf32>
    %cst_6 = arith.constant 0.000000e+00 : f32
    %9 = vector.broadcast %cst_6 : f32 to vector<16x32xf32>
    %10 = arith.maximumf %8, %9 : vector<16x32xf32>
    %c0_7 = arith.constant 0 : index
    %c0_8 = arith.constant 0 : index
    %11 = vector.load %arg4[%c0_7, %c0_8] : memref<32x8xf32, #tpu.memory_space<vmem>>, vector<32x8xf32>
    %cst_9 = arith.constant dense<0.000000e+00> : vector<16x8xf32>
    %12 = tpu.matmul %10, %11, %cst_9 {dimension_numbers = #tpu.dot_dimension_numbers<[1], [0], [0], [1], [0, 0, 1, 1], [], []>} : vector<16x32xf32>, vector<32x8xf32>, vector<16x8xf32> -> vector<16x8xf32>
    %c0_10 = arith.constant 0 : index
    %c0_11 = arith.constant 0 : index
    %13 = vector.load %arg5[%c0_10, %c0_11] : memref<1x8xf32, #tpu.memory_space<vmem>>, vector<1x8xf32>
    %14 = vector.broadcast %13 : vector<1x8xf32> to vector<16x8xf32>
    %15 = arith.addf %12, %14 : vector<16x8xf32>
    %c0_12 = arith.constant 0 : index
    %c0_13 = arith.constant 0 : index
    %16 = vector.load %arg6[%c0_12, %c0_13] : memref<1x8xf32, #tpu.memory_space<vmem>>, vector<1x8xf32>
    %cst_14 = arith.constant 1.000000e+00 : f32
    %17 = vector.broadcast %cst_14 : f32 to vector<1x8xf32>
    %18 = arith.subf %17, %16 : vector<1x8xf32>
    %cst_15 = arith.constant -1.000000e+09 : f32
    %19 = vector.broadcast %cst_15 : f32 to vector<1x8xf32>
    %20 = arith.mulf %18, %19 : vector<1x8xf32>
    %21 = vector.broadcast %20 : vector<1x8xf32> to vector<16x8xf32>
    %22 = arith.addf %15, %21 : vector<16x8xf32>
    %cst_16 = arith.constant dense<0xFF800000> : vector<16xf32>
    %23 = vector.multi_reduction <maximumf>, %22, %cst_16 [1] : vector<16x8xf32> to vector<16xf32>
    %24 = vector.shape_cast %23 : vector<16xf32> to vector<16x1xf32>
    %25 = vector.broadcast %24 : vector<16x1xf32> to vector<16x8xf32>
    %26 = arith.subf %22, %25 : vector<16x8xf32>
    %27 = math.exp %26 : vector<16x8xf32>
    %cst_17 = arith.constant dense<0.000000e+00> : vector<16xf32>
    %28 = vector.multi_reduction <add>, %27, %cst_17 [1] : vector<16x8xf32> to vector<16xf32>
    %29 = vector.shape_cast %28 : vector<16xf32> to vector<16x1xf32>
    %30 = tpu.reciprocal %29 : vector<16x1xf32> -> vector<16x1xf32>
    %31 = vector.broadcast %30 : vector<16x1xf32> to vector<16x8xf32>
    %32 = arith.mulf %27, %31 : vector<16x8xf32>
    %c0_18 = arith.constant 0 : index
    %c0_19 = arith.constant 0 : index
    %33 = vector.load %arg7[%c0_18, %c0_19] : memref<16x8xf32, #tpu.memory_space<vmem>>, vector<16x8xf32>
    tpu.vector_store %arg7[%c0_18, %c0_19], %32 {strides = array<i32>} : memref<16x8xf32, #tpu.memory_space<vmem>>, vector<16x8xf32>,
    %c0_20 = arith.constant 0 : index
    %c0_21 = arith.constant 0 : index
    %34 = vector.load %arg10[%c0_20, %c0_21] : memref<1x8xf32, #tpu.memory_space<vmem>>, vector<1x8xf32>
    %cst_22 = arith.constant dense<0.000000e+00> : vector<8xf32>
    %35 = vector.multi_reduction <add>, %32, %cst_22 [0] : vector<16x8xf32> to vector<8xf32>
    %36 = vector.shape_cast %35 : vector<8xf32> to vector<1x8xf32>
    %37 = arith.addf %34, %36 : vector<1x8xf32>
    %c0_23 = arith.constant 0 : index
    %c0_24 = arith.constant 0 : index
    %38 = vector.load %arg10[%c0_23, %c0_24] : memref<1x8xf32, #tpu.memory_space<vmem>>, vector<1x8xf32>
    tpu.vector_store %arg10[%c0_23, %c0_24], %37 {strides = array<i32>} : memref<1x8xf32, #tpu.memory_space<vmem>>, vector<1x8xf32>,
    %39 = tpu.iota {dimensions = array<i32: 1>} : vector<16x8xi32>
    %40 = tpu.iota {dimensions = array<i32: 0>} : vector<2x1xi32>
    %cst_25 = arith.constant 0.000000e+00 : f32
    %41 = vector.broadcast %cst_25 : f32 to vector<2x8xf32>
    %cst_26 = arith.constant dense<0xFF800000> : vector<16xf32>
    %42 = vector.multi_reduction <maximumf>, %32, %cst_26 [1] : vector<16x8xf32> to vector<16xf32>
    %43 = vector.shape_cast %42 : vector<16xf32> to vector<16x1xf32>
    %44 = vector.broadcast %43 : vector<16x1xf32> to vector<16x8xf32>
    %45 = arith.cmpf oeq, %32, %44 : vector<16x8xf32>
    %c8_i32 = arith.constant 8 : i32
    %46 = vector.broadcast %c8_i32 : i32 to vector<16x8xi32>
    %47 = arith.select %45, %39, %46 : vector<16x8xi1>, vector<16x8xi32>
    %cst_27 = arith.constant dense<2147483647> : vector<16xi32>
    %48 = vector.multi_reduction <minsi>, %47, %cst_27 [1] : vector<16x8xi32> to vector<16xi32>
    %49 = vector.shape_cast %48 : vector<16xi32> to vector<16x1xi32>
    %50 = vector.broadcast %49 : vector<16x1xi32> to vector<16x8xi32>
    %51 = arith.cmpi eq, %39, %50 : vector<16x8xi32>
    %52 = arith.extui %51 : vector<16x8xi1> to vector<16x8xi32>
    %53 = arith.sitofp %52 : vector<16x8xi32> to vector<16x8xf32>
    %cst_28 = arith.constant dense<0xFF800000> : vector<8xf32>
    %54 = vector.multi_reduction <maximumf>, %53, %cst_28 [0] : vector<16x8xf32> to vector<8xf32>
    %55 = vector.shape_cast %54 : vector<8xf32> to vector<1x8xf32>
    %c0_i32_29 = arith.constant 0 : i32
    %56 = vector.broadcast %c0_i32_29 : i32 to vector<2x1xi32>
    %57 = arith.cmpi eq, %40, %56 : vector<2x1xi32>
    %cst_30 = arith.constant 0.000000e+00 : f32
    %58 = vector.shape_cast %57 : vector<2x1xi1> to vector<2x1xi1>
    %59 = vector.broadcast %58 : vector<2x1xi1> to vector<2x8xi1>
    %60 = vector.shape_cast %55 : vector<1x8xf32> to vector<1x8xf32>
    %61 = vector.broadcast %60 : vector<1x8xf32> to vector<2x8xf32>
    %62 = vector.broadcast %cst_30 : f32 to vector<2x8xf32>
    %63 = arith.select %59, %61, %62 : vector<2x8xi1>, vector<2x8xf32>
    %64 = arith.addf %41, %63 : vector<2x8xf32>
    %cst_31 = arith.constant 0xFF800000 : f32
    %65 = vector.broadcast %cst_31 : f32 to vector<16x8xf32>
    %66 = arith.select %51, %65, %32 : vector<16x8xi1>, vector<16x8xf32>
    %cst_32 = arith.constant dense<0xFF800000> : vector<16xf32>
    %67 = vector.multi_reduction <maximumf>, %66, %cst_32 [1] : vector<16x8xf32> to vector<16xf32>
    %68 = vector.shape_cast %67 : vector<16xf32> to vector<16x1xf32>
    %69 = vector.broadcast %68 : vector<16x1xf32> to vector<16x8xf32>
    %70 = arith.cmpf oeq, %66, %69 : vector<16x8xf32>
    %c8_i32_33 = arith.constant 8 : i32
    %71 = vector.broadcast %c8_i32_33 : i32 to vector<16x8xi32>
    %72 = arith.select %70, %39, %71 : vector<16x8xi1>, vector<16x8xi32>
    %cst_34 = arith.constant dense<2147483647> : vector<16xi32>
    %73 = vector.multi_reduction <minsi>, %72, %cst_34 [1] : vector<16x8xi32> to vector<16xi32>
    %74 = vector.shape_cast %73 : vector<16xi32> to vector<16x1xi32>
    %75 = vector.broadcast %74 : vector<16x1xi32> to vector<16x8xi32>
    %76 = arith.cmpi eq, %39, %75 : vector<16x8xi32>
    %77 = arith.extui %76 : vector<16x8xi1> to vector<16x8xi32>
    %78 = arith.sitofp %77 : vector<16x8xi32> to vector<16x8xf32>
    %cst_35 = arith.constant dense<0xFF800000> : vector<8xf32>
    %79 = vector.multi_reduction <maximumf>, %78, %cst_35 [0] : vector<16x8xf32> to vector<8xf32>
    %80 = vector.shape_cast %79 : vector<8xf32> to vector<1x8xf32>
    %c1_i32 = arith.constant 1 : i32
    %81 = vector.broadcast %c1_i32 : i32 to vector<2x1xi32>
    %82 = arith.cmpi eq, %40, %81 : vector<2x1xi32>
    %cst_36 = arith.constant 0.000000e+00 : f32
    %83 = vector.shape_cast %82 : vector<2x1xi1> to vector<2x1xi1>
    %84 = vector.broadcast %83 : vector<2x1xi1> to vector<2x8xi1>
    %85 = vector.shape_cast %80 : vector<1x8xf32> to vector<1x8xf32>
    %86 = vector.broadcast %85 : vector<1x8xf32> to vector<2x8xf32>
    %87 = vector.broadcast %cst_36 : f32 to vector<2x8xf32>
    %88 = arith.select %84, %86, %87 : vector<2x8xi1>, vector<2x8xf32>
    %89 = arith.addf %64, %88 : vector<2x8xf32>
    %c0_37 = arith.constant 0 : index
    %c0_38 = arith.constant 0 : index
    %90 = vector.load %arg8[%c0_37, %c0_38] : memref<2x8xf32, #tpu.memory_space<vmem>>, vector<2x8xf32>
    %91 = arith.maximumf %90, %89 : vector<2x8xf32>
    %c0_39 = arith.constant 0 : index
    %c0_40 = arith.constant 0 : index
    %92 = vector.load %arg8[%c0_39, %c0_40] : memref<2x8xf32, #tpu.memory_space<vmem>>, vector<2x8xf32>
    tpu.vector_store %arg8[%c0_39, %c0_40], %91 {strides = array<i32>} : memref<2x8xf32, #tpu.memory_space<vmem>>, vector<2x8xf32>,
    %c0_i32_41 = arith.constant 0 : i32
    %93 = arith.cmpi eq, %arg0, %c0_i32_41 : i32
    %94 = arith.extui %93 : i1 to i32
    %c0_i32_42 = arith.constant 0 : i32
    %95 = arith.cmpi ne, %94, %c0_i32_42 : i32
    scf.if %95 {
      %c0_43 = arith.constant 0 : index
      %c0_44 = arith.constant 0 : index
      %96 = vector.load %arg10[%c0_43, %c0_44] : memref<1x8xf32, #tpu.memory_space<vmem>>, vector<1x8xf32>
      %cst_45 = arith.constant 6.250000e-02 : f32
      %97 = vector.broadcast %cst_45 : f32 to vector<1x8xf32>
      %98 = arith.mulf %96, %97 : vector<1x8xf32>
      %cst_46 = arith.constant 8.000000e+00 : f32
      %99 = vector.broadcast %cst_46 : f32 to vector<1x8xf32>
      %100 = arith.mulf %98, %99 : vector<1x8xf32>
      %cst_47 = arith.constant 9.99999971E-10 : f32
      %101 = vector.broadcast %cst_47 : f32 to vector<1x8xf32>
      %102 = arith.addf %100, %101 : vector<1x8xf32>
      %103 = math.log %102 : vector<1x8xf32>
      %104 = arith.mulf %98, %103 : vector<1x8xf32>
      %cst_48 = arith.constant dense<0.000000e+00> : vector<1xf32>
      %105 = vector.multi_reduction <add>, %104, %cst_48 [1] : vector<1x8xf32> to vector<1xf32>
      %106 = vector.shape_cast %105 : vector<1xf32> to vector<1x1xf32>
      %cst_49 = arith.constant 9.99999971E-10 : f32
      %107 = vector.broadcast %cst_49 : f32 to vector<1x8xf32>
      %108 = arith.addf %98, %107 : vector<1x8xf32>
      %109 = math.log %108 : vector<1x8xf32>
      %110 = arith.mulf %98, %109 : vector<1x8xf32>
      %cst_50 = arith.constant dense<0.000000e+00> : vector<1xf32>
      %111 = vector.multi_reduction <add>, %110, %cst_50 [1] : vector<1x8xf32> to vector<1xf32>
      %112 = vector.shape_cast %111 : vector<1xf32> to vector<1x1xf32>
      %cst_51 = arith.constant 0.000000e+00 : f32
      %113 = vector.broadcast %cst_51 : f32 to vector<1x1xf32>
      %114 = arith.subf %113, %112 : vector<1x1xf32>
      %cst_52 = arith.constant 2.07944155 : f32
      %115 = vector.broadcast %cst_52 : f32 to vector<1x1xf32>
      %116 = arith.divf %114, %115 : vector<1x1xf32>
      %cst_53 = arith.constant 0.00999999977 : f32
      %117 = vector.broadcast %cst_53 : f32 to vector<1x1xf32>
      %118 = arith.mulf %117, %116 : vector<1x1xf32>
      %119 = arith.subf %106, %118 : vector<1x1xf32>
      %c0_54 = arith.constant 0 : index
      %c0_55 = arith.constant 0 : index
      %120 = vector.load %arg9[%c0_54, %c0_55] : memref<1x1xf32, #tpu.memory_space<vmem>>, vector<1x1xf32>
      tpu.vector_store %arg9[%c0_54, %c0_55], %119 {strides = array<i32>} : memref<1x1xf32, #tpu.memory_space<vmem>>, vector<1x1xf32>,
    } else {
    }
    return
  }
  func.func @transform_0(%arg0: i32) -> (i32, i32) {
    %c0_i32 = arith.constant 0 : i32
    %c0_i32_0 = arith.constant 0 : i32
    return %arg0, %c0_i32 : i32, i32
  }
  func.func @transform_1(%arg0: i32) -> (i32, i32) {
    %c0_i32 = arith.constant 0 : i32
    %c0_i32_0 = arith.constant 0 : i32
    %c0_i32_1 = arith.constant 0 : i32
    return %c0_i32, %c0_i32_0 : i32, i32
  }
  func.func @transform_2(%arg0: i32) -> (i32, i32) {
    %c0_i32 = arith.constant 0 : i32
    %c0_i32_0 = arith.constant 0 : i32
    %c0_i32_1 = arith.constant 0 : i32
    return %c0_i32, %c0_i32_0 : i32, i32
  }
  func.func @transform_3(%arg0: i32) -> (i32, i32) {
    %c0_i32 = arith.constant 0 : i32
    %c0_i32_0 = arith.constant 0 : i32
    %c0_i32_1 = arith.constant 0 : i32
    return %c0_i32, %c0_i32_0 : i32, i32
  }
  func.func @transform_4(%arg0: i32) -> (i32, i32) {
    %c0_i32 = arith.constant 0 : i32
    %c0_i32_0 = arith.constant 0 : i32
    %c0_i32_1 = arith.constant 0 : i32
    return %c0_i32, %c0_i32_0 : i32, i32
  }
  func.func @transform_5(%arg0: i32) -> (i32, i32) {
    %c0_i32 = arith.constant 0 : i32
    %c0_i32_0 = arith.constant 0 : i32
    %c0_i32_1 = arith.constant 0 : i32
    return %c0_i32, %c0_i32_0 : i32, i32
  }
  func.func @transform_6(%arg0: i32) -> (i32, i32) {
    %c0_i32 = arith.constant 0 : i32
    %c0_i32_0 = arith.constant 0 : i32
    return %arg0, %c0_i32 : i32, i32
  }
  func.func @transform_7(%arg0: i32) -> (i32, i32) {
    %c0_i32 = arith.constant 0 : i32
    %c0_i32_0 = arith.constant 0 : i32
    %c0_i32_1 = arith.constant 0 : i32
    return %c0_i32, %c0_i32_0 : i32, i32
  }
  func.func @transform_8(%arg0: i32) -> (i32, i32) {
    %c0_i32 = arith.constant 0 : i32
    %c0_i32_0 = arith.constant 0 : i32
    %c0_i32_1 = arith.constant 0 : i32
    return %c0_i32, %c0_i32_0 : i32, i32
  }
}

</mosaic_0001>

<llo_original>
// kernel: tpu_custom_call.1
$region0: #{tpu_custom_call.1}
  #allocation0 [shape = 'u32[]', space=smem, size = 0x4, offset = 0x4, fixed_abs, tag = 'smem constant byte address 0x4 - core index']
  #allocation1 [shape = 'u32[144,128]{1,0:T(1,128)}', space=vmem, size = 0x12000, scoped, tag = 'internal scratch']
  #allocation2 [shape = 'f32[1,8]{1,0:T(1,128)}', space=vmem, size = 0x200, scoped, tag = 'scratch operand']
  %s0 = inlined_call_operand.hbm [shape: f32[16,32], index: 0, kind: input, shape index: {}]
  %s1 = inlined_call_operand.hbm [shape: f32[32,32], index: 1, kind: input, shape index: {}]
  %s2 = inlined_call_operand.hbm [shape: f32[1,32], index: 2, kind: input, shape index: {}]
  %s3 = inlined_call_operand.hbm [shape: f32[32,8], index: 3, kind: input, shape index: {}]
  %s4 = inlined_call_operand.hbm [shape: f32[1,8], index: 4, kind: input, shape index: {}]
  %s5 = inlined_call_operand.hbm [shape: f32[1,8], index: 5, kind: input, shape index: {}]
  %s6 = inlined_call_operand.hbm [shape: f32[16,8], index: 6, kind: output, shape index: {0}]
  %s7 = inlined_call_operand.hbm [shape: f32[2,8], index: 7, kind: output, shape index: {1}]
  %s8 = inlined_call_operand.hbm [shape: f32[1,1], index: 8, kind: output, shape index: {2}]
  %9 = xla_tuple %s6, %s7, %s8
  %s10 = sld [smem:[#allocation0]]
  $region82: #{tpu_custom_call.1} parent=0
    _
  %s12 = ssub.s32 1, %s10
  %s13 = scalar_select 0, %s12, %s10
  $region1: #{tpu_custom_call.1} parent=0
    #allocation3 [shape = 'u8[8192]{0}', space=vmem, size = 0x2000, scoped, tag = 'input window, operand 0, single buffered']
    #allocation4 [shape = 's32[1]{0}', space=sflag, size = 0x4, scoped, tag = 'scoped memory for tpu_custom_call.1']
    #allocation5 [shape = 's32[1]{0}', space=sflag, size = 0x4, scoped, tag = 'scoped memory for tpu_custom_call.1']
    #allocation6 [shape = 'u8[16384]{0}', space=vmem, size = 0x4000, scoped, tag = 'input window, operand 1, single buffered']
    #allocation7 [shape = 's32[1]{0}', space=sflag, size = 0x4, scoped, tag = 'scoped memory for tpu_custom_call.1']
    #allocation8 [shape = 'u8[512]{0}', space=vmem, size = 0x400, scoped, tag = 'input window, operand 2, single buffered']
    #allocation9 [shape = 'u8[16384]{0}', space=vmem, size = 0x4000, scoped, tag = 'input window, operand 3, single buffered']
    #allocation10 [shape = 's32[1]{0}', space=sflag, size = 0x4, scoped, tag = 'scoped memory for tpu_custom_call.1']
    #allocation11 [shape = 'u8[512]{0}', space=vmem, size = 0x400, scoped, tag = 'input window, operand 4, single buffered']
    #allocation12 [shape = 'u8[512]{0}', space=vmem, size = 0x400, scoped, tag = 'input window, operand 5, single buffered']
    #allocation13 [shape = 's32[1]{0}', space=sflag, size = 0x4, scoped, tag = 'scoped memory for tpu_custom_call.1']
    #allocation14 [shape = 'u8[8192]{0}', space=vmem, size = 0x2000, scoped, tag = 'output window, operand 0, single buffered']
    #allocation15 [shape = 'u8[1024]{0}', space=vmem, size = 0x400, scoped, tag = 'output window, operand 1, single buffered']
    #allocation16 [shape = 's32[1]{0}', space=sflag, size = 0x4, scoped, tag = 'scoped memory for tpu_custom_call.1']
    #allocation17 [shape = 'u8[512]{0}', space=vmem, size = 0x400, scoped, tag = 'output window, operand 2, single buffered']
    %14 = vsyncpa [#allocation4], 0
    %15 = vsyncpa [#allocation7], 0
    %16 = vsyncpa [#allocation10], 0
    %17 = vsyncpa [#allocation13], 0
    %18 = vsyncpa [#allocation5], 0
    %19 = vsyncpa [#allocation16], 0
    // Predicated region
    $region2: #{tpu_custom_call.1} parent=1 // pred_check
      _
    $region3: #{tpu_custom_call.1} parent=1 // pred_check_branch
      %21 = sbr.rel (0) target = $region5
    $region4: #{tpu_custom_call.1} parent=1 // pred_region
      %s23 = ssub.s32 256, 256
      %24 = vsyncadd [#allocation4], %s23
      %s25 = sshll.u32 [#allocation3], 4
      %s26 = int_to_ptr.vmem [resolvable:$true] %s25
      %31 = dma.hbm_to_vmem [thread:$0]  %s0, 256, %s26, [#allocation4], 128, 128, 8
    $region5: #{tpu_custom_call.1} parent=1 // pred_fallthru
      _
    // Predicated region
    $region6: #{tpu_custom_call.1} parent=1 // pred_check
      _
    $region7: #{tpu_custom_call.1} parent=1 // pred_check_branch
      %33 = sbr.rel (0) target = $region9
    $region8: #{tpu_custom_call.1} parent=1 // pred_region
      %s35 = ssub.s32 512, 512
      %36 = vsyncadd [#allocation7], %s35
      %s37 = sshll.u32 [#allocation6], 4
      %s38 = int_to_ptr.vmem [resolvable:$true] %s37
      %43 = dma.hbm_to_vmem [thread:$0]  %s1, 512, %s38, [#allocation7], 128, 128, 8
    $region9: #{tpu_custom_call.1} parent=1 // pred_fallthru
      _
    // Predicated region
    $region10: #{tpu_custom_call.1} parent=1 // pred_check
      _
    $region11: #{tpu_custom_call.1} parent=1 // pred_check_branch
      %45 = sbr.rel (0) target = $region13
    $region12: #{tpu_custom_call.1} parent=1 // pred_region
      %s47 = ssub.s32 16, 16
      %48 = vsyncadd [#allocation7], %s47
      %s50 = sshll.u32 [#allocation8], 4
      %s51 = int_to_ptr.vmem [resolvable:$true] %s50
      %53 = dma.hbm_to_vmem [thread:$0]  %s2, 16, %s51, [#allocation7]
    $region13: #{tpu_custom_call.1} parent=1 // pred_fallthru
      _
    // Predicated region
    $region14: #{tpu_custom_call.1} parent=1 // pred_check
      _
    $region15: #{tpu_custom_call.1} parent=1 // pred_check_branch
      %55 = sbr.rel (0) target = $region17
    $region16: #{tpu_custom_call.1} parent=1 // pred_region
      %s57 = ssub.s32 512, 512
      %58 = vsyncadd [#allocation10], %s57
      %s59 = sshll.u32 [#allocation9], 4
      %s60 = int_to_ptr.vmem [resolvable:$true] %s59
      %65 = dma.hbm_to_vmem [thread:$0]  %s3, 512, %s60, [#allocation10], 128, 128, 8
    $region17: #{tpu_custom_call.1} parent=1 // pred_fallthru
      _
    // Predicated region
    $region18: #{tpu_custom_call.1} parent=1 // pred_check
      _
    $region19: #{tpu_custom_call.1} parent=1 // pred_check_branch
      %67 = sbr.rel (0) target = $region21
    $region20: #{tpu_custom_call.1} parent=1 // pred_region
      %s69 = ssub.s32 16, 16
      %70 = vsyncadd [#allocation10], %s69
      %s72 = sshll.u32 [#allocation11], 4
      %s73 = int_to_ptr.vmem [resolvable:$true] %s72
      %75 = dma.hbm_to_vmem [thread:$0]  %s4, 16, %s73, [#allocation10]
    $region21: #{tpu_custom_call.1} parent=1 // pred_fallthru
      _
    // Predicated region
    $region22: #{tpu_custom_call.1} parent=1 // pred_check
      _
    $region23: #{tpu_custom_call.1} parent=1 // pred_check_branch
      %77 = sbr.rel (0) target = $region25
    $region24: #{tpu_custom_call.1} parent=1 // pred_region
      %s79 = ssub.s32 16, 16
      %80 = vsyncadd [#allocation13], %s79
      %s82 = sshll.u32 [#allocation12], 4
      %s83 = int_to_ptr.vmem [resolvable:$true] %s82
      %85 = dma.hbm_to_vmem [thread:$0]  %s5, 16, %s83, [#allocation13]
    $region25: #{tpu_custom_call.1} parent=1 // pred_fallthru
      _
    // Predicated region
    $region26: #{tpu_custom_call.1} parent=1 // pred_check
      _
    $region27: #{tpu_custom_call.1} parent=1 // pred_check_branch
      %87 = sbr.rel (0) target = $region29
    $region28: #{tpu_custom_call.1} parent=1 // pred_region
      %88 = dma.done [#allocation4], 256
    $region29: #{tpu_custom_call.1} parent=1 // pred_fallthru
      _
    // Predicated region
    $region30: #{tpu_custom_call.1} parent=1 // pred_check
      _
    $region31: #{tpu_custom_call.1} parent=1 // pred_check_branch
      %90 = sbr.rel (0) target = $region33
    $region32: #{tpu_custom_call.1} parent=1 // pred_region
      %91 = dma.done [#allocation7], 512
    $region33: #{tpu_custom_call.1} parent=1 // pred_fallthru
      _
    // Predicated region
    $region34: #{tpu_custom_call.1} parent=1 // pred_check
      _
    $region35: #{tpu_custom_call.1} parent=1 // pred_check_branch
      %93 = sbr.rel (0) target = $region37
    $region36: #{tpu_custom_call.1} parent=1 // pred_region
      %94 = dma.done [#allocation7], 16
    $region37: #{tpu_custom_call.1} parent=1 // pred_fallthru
      _
    // Predicated region
    $region38: #{tpu_custom_call.1} parent=1 // pred_check
      _
    $region39: #{tpu_custom_call.1} parent=1 // pred_check_branch
      %96 = sbr.rel (0) target = $region41
    $region40: #{tpu_custom_call.1} parent=1 // pred_region
      %97 = dma.done [#allocation10], 512
    $region41: #{tpu_custom_call.1} parent=1 // pred_fallthru
      _
    // Predicated region
    $region42: #{tpu_custom_call.1} parent=1 // pred_check
      _
    $region43: #{tpu_custom_call.1} parent=1 // pred_check_branch
      %99 = sbr.rel (0) target = $region45
    $region44: #{tpu_custom_call.1} parent=1 // pred_region
      %100 = dma.done [#allocation10], 16
    $region45: #{tpu_custom_call.1} parent=1 // pred_fallthru
      _
    // Predicated region
    $region46: #{tpu_custom_call.1} parent=1 // pred_check
      _
    $region47: #{tpu_custom_call.1} parent=1 // pred_check_branch
      %102 = sbr.rel (0) target = $region49
    $region48: #{tpu_custom_call.1} parent=1 // pred_region
      %103 = dma.done [#allocation13], 16
    $region49: #{tpu_custom_call.1} parent=1 // pred_fallthru
      _
    %p104 = scmp.eq.s32.totalorder 0, 0
    // Predicated region
    $region50: #{tpu_custom_call.1} parent=1 // pred_check
      %p105 = pneg %p104
    $region51: #{tpu_custom_call.1} parent=1 // pred_check_branch
      %107 = sbr.rel (%p105) target = $region53
    $region52: #{tpu_custom_call.1} parent=1 // pred_region
      %vm108 = vcmask 58368
      %109 = vst.msk [vmem:[#allocation15] sm:$0x3] %vm108, 0.0
      %vm110 = vcmask 0
      %111 = vst.msk [vmem:[#allocation17] sm:$0x1] %vm110, 0.0
      %vm112 = vcmask 57344
      %113 = vst.msk [vmem:[#allocation2] sm:$0x1] %vm112, 0.0
    $region53: #{tpu_custom_call.1} parent=1 // pred_fallthru
      _
    %v114 = vld [vmem:[#allocation3] sm:$0xff]
    %v115 = vld [vmem:[#allocation3 + $0x8] sm:$0xff]
    %v116 = vld [vmem:[#allocation6] sm:$0xff]
    %v117 = vld [vmem:[#allocation6 + $0x8] sm:$0xff]
    %v118 = vld [vmem:[#allocation6 + $0x10] sm:$0xff]
    %v119 = vld [vmem:[#allocation6 + $0x18] sm:$0xff]
    %v120 = vld [vmem:[#allocation8] sm:$0x1]
    %v122 = vlaneseq
    %v123 = vshrl.u32 %v122, 7
    %v124 = vsub.s32 0, %v123
    %v125 = vrot.slane %v120, %v124
    %vm127 = vcmask 261120
    %v129 = vsel %vm127, %v114, 0
    %v132 = vsel %vm127, %v115, 0
    %134 = vmatprep.subr.mxu0 0.0
    %135 = vmatpush1.msra.mxu0 %v116
    %136 = vmatprep.subr.mxu0 0.0
    %137 = vmatpush1.msra.mxu0 %v117
    %138 = vmatprep.subr.mxu0 0.0
    %139 = vmatpush1.msra.mxu0 %v118
    %140 = vmatprep.subr.mxu0 0.0
    %141 = vmatpush1.msra.mxu0 %v119
    %142 = vmatprep.subr.mxu0 0.0
    %143 = vmatpush1.msra.mxu0 0.0
    %144 = vmatprep.subr.mxu0 0.0
    %145 = vmatpush1.msra.mxu0 0.0
    %146 = vmatprep.subr.mxu0 0.0
    %147 = vmatpush1.msra.mxu0 0.0
    %148 = vmatprep.subr.mxu0 0.0
    %149 = vmatpush1.msra.mxu0 0.0
    %150 = vmatprep.subr.mxu0 0.0
    %151 = vmatpush1.msra.mxu0 0.0
    %152 = vmatprep.subr.mxu0 0.0
    %153 = vmatpush1.msra.mxu0 0.0
    %154 = vmatprep.subr.mxu0 0.0
    %155 = vmatpush1.msra.mxu0 0.0
    %156 = vmatprep.subr.mxu0 0.0
    %157 = vmatpush1.msra.mxu0 0.0
    %158 = vmatprep.subr.mxu0 0.0
    %159 = vmatpush1.msra.mxu0 0.0
    %160 = vmatprep.subr.mxu0 0.0
    %161 = vmatpush1.msra.mxu0 0.0
    %162 = vmatprep.subr.mxu0 0.0
    %163 = vmatpush1.msra.mxu0 0.0
    %164 = vmatprep.subr.mxu0 0.0
    %165 = vmatpush1.msra.mxu0 0.0
    %166 = vmatprep.subr.mxu0 0.0
    %167 = vmatpush1.msra.mxu0 0.0
    %168 = vmatprep.subr.mxu0 0.0
    %169 = vmatpush1.msra.mxu0 0.0
    %170 = vmatprep.subr.mxu0 0.0
    %171 = vmatpush1.msra.mxu0 0.0
    %172 = vmatprep.subr.mxu0 0.0
    %173 = vmatpush1.msra.mxu0 0.0
    %174 = vmatprep.subr.mxu0 0.0
    %175 = vmatpush1.msra.mxu0 0.0
    %176 = vmatprep.subr.mxu0 0.0
    %177 = vmatpush1.msra.mxu0 0.0
    %178 = vmatprep.subr.mxu0 0.0
    %179 = vmatpush1.msra.mxu0 0.0
    %180 = vmatprep.subr.mxu0 0.0
    %181 = vmatpush1.msra.mxu0 0.0
    %182 = vmatprep.subr.mxu0 0.0
    %183 = vmatpush1.msra.mxu0 0.0
    %184 = vmatprep.subr.mxu0 0.0
    %185 = vmatpush1.msra.mxu0 0.0
    %186 = vmatprep.subr.mxu0 0.0
    %187 = vmatpush1.msra.mxu0 0.0
    %188 = vmatprep.subr.mxu0 0.0
    %189 = vmatpush1.msra.mxu0 0.0
    %190 = vmatprep.subr.mxu0 0.0
    %191 = vmatpush1.msra.mxu0 0.0
    %192 = vmatprep.subr.mxu0 0.0
    %193 = vmatpush1.msra.mxu0 0.0
    %194 = vmatprep.subr.mxu0 0.0
    %195 = vmatpush1.msra.mxu0 0.0
    %196 = vmatprep.subr.mxu0 0.0
    %197 = vmatpush1.msra.mxu0 0.0
    %198 = vmatprep.mubr.f32.mxu0 0.0
    %199 = vmatmul.mubr.f32.gmra.mrb[0].mxu0 %v129
    %v200 = vpop.f32.mrb[0].mxu0
    %v201 = vadd.f32 %v125, %v200
    %v202 = vpop.f32.mrb[0].mxu0
    %203 = vmatprep.mubr.f32.mxu0 0.0
    %204 = vmatmul.mubr.f32.gmra.mrb[0].mxu0 %v132
    %v205 = vpop.f32.mrb[0].mxu0
    %v206 = vadd.f32 %v125, %v205
    %v207 = vpop.f32.mrb[0].mxu0
    %208 = vdwg.mxu0
    %v209 = vmax.f32 %v201, 0.0
    %v210 = vmax.f32 %v206, 0.0
    %v211 = vld [vmem:[#allocation9] sm:$0xff]
    %v212 = vld [vmem:[#allocation9 + $0x8] sm:$0xff]
    %v213 = vld [vmem:[#allocation9 + $0x10] sm:$0xff]
    %v214 = vld [vmem:[#allocation9 + $0x18] sm:$0xff]
    %v215 = vld [vmem:[#allocation11] sm:$0x1]
    %v217 = vlaneseq
    %v218 = vshrl.u32 %v217, 7
    %v219 = vsub.s32 0, %v218
    %v220 = vrot.slane %v215, %v219
    %v223 = vsel %vm127, %v209, 0
    %v226 = vsel %vm127, %v210, 0
    %228 = vmatprep.subr.mxu0 0.0
    %229 = vmatpush1.msra.mxu0 %v211
    %230 = vmatprep.subr.mxu0 0.0
    %231 = vmatpush1.msra.mxu0 %v212
    %232 = vmatprep.subr.mxu0 0.0
    %233 = vmatpush1.msra.mxu0 %v213
    %234 = vmatprep.subr.mxu0 0.0
    %235 = vmatpush1.msra.mxu0 %v214
    %236 = vmatprep.subr.mxu0 0.0
    %237 = vmatpush1.msra.mxu0 0.0
    %238 = vmatprep.subr.mxu0 0.0
    %239 = vmatpush1.msra.mxu0 0.0
    %240 = vmatprep.subr.mxu0 0.0
    %241 = vmatpush1.msra.mxu0 0.0
    %242 = vmatprep.subr.mxu0 0.0
    %243 = vmatpush1.msra.mxu0 0.0
    %244 = vmatprep.subr.mxu0 0.0
    %245 = vmatpush1.msra.mxu0 0.0
    %246 = vmatprep.subr.mxu0 0.0
    %247 = vmatpush1.msra.mxu0 0.0
    %248 = vmatprep.subr.mxu0 0.0
    %249 = vmatpush1.msra.mxu0 0.0
    %250 = vmatprep.subr.mxu0 0.0
    %251 = vmatpush1.msra.mxu0 0.0
    %252 = vmatprep.subr.mxu0 0.0
    %253 = vmatpush1.msra.mxu0 0.0
    %254 = vmatprep.subr.mxu0 0.0
    %255 = vmatpush1.msra.mxu0 0.0
    %256 = vmatprep.subr.mxu0 0.0
    %257 = vmatpush1.msra.mxu0 0.0
    %258 = vmatprep.subr.mxu0 0.0
    %259 = vmatpush1.msra.mxu0 0.0
    %260 = vmatprep.subr.mxu0 0.0
    %261 = vmatpush1.msra.mxu0 0.0
    %262 = vmatprep.subr.mxu0 0.0
    %263 = vmatpush1.msra.mxu0 0.0
    %264 = vmatprep.subr.mxu0 0.0
    %265 = vmatpush1.msra.mxu0 0.0
    %266 = vmatprep.subr.mxu0 0.0
    %267 = vmatpush1.msra.mxu0 0.0
    %268 = vmatprep.subr.mxu0 0.0
    %269 = vmatpush1.msra.mxu0 0.0
    %270 = vmatprep.subr.mxu0 0.0
    %271 = vmatpush1.msra.mxu0 0.0
    %272 = vmatprep.subr.mxu0 0.0
    %273 = vmatpush1.msra.mxu0 0.0
    %274 = vmatprep.subr.mxu0 0.0
    %275 = vmatpush1.msra.mxu0 0.0
    %276 = vmatprep.subr.mxu0 0.0
    %277 = vmatpush1.msra.mxu0 0.0
    %278 = vmatprep.subr.mxu0 0.0
    %279 = vmatpush1.msra.mxu0 0.0
    %280 = vmatprep.subr.mxu0 0.0
    %281 = vmatpush1.msra.mxu0 0.0
    %282 = vmatprep.subr.mxu0 0.0
    %283 = vmatpush1.msra.mxu0 0.0
    %284 = vmatprep.subr.mxu0 0.0
    %285 = vmatpush1.msra.mxu0 0.0
    %286 = vmatprep.subr.mxu0 0.0
    %287 = vmatpush1.msra.mxu0 0.0
    %288 = vmatprep.subr.mxu0 0.0
    %289 = vmatpush1.msra.mxu0 0.0
    %290 = vmatprep.subr.mxu0 0.0
    %291 = vmatpush1.msra.mxu0 0.0
    %292 = vmatprep.mubr.f32.mxu0 0.0
    %293 = vmatmul.mubr.f32.gmra.mrb[0].mxu0 %v223
    %v294 = vpop.f32.mrb[0].mxu0
    %v295 = vadd.f32 %v220, %v294
    %v296 = vpop.f32.mrb[0].mxu0
    %297 = vmatprep.mubr.f32.mxu0 0.0
    %298 = vmatmul.mubr.f32.gmra.mrb[0].mxu0 %v226
    %v299 = vpop.f32.mrb[0].mxu0
    %v300 = vadd.f32 %v220, %v299
    %v301 = vpop.f32.mrb[0].mxu0
    %302 = vdwg.mxu0
    %v303 = vld [vmem:[#allocation12] sm:$0x1]
    %v304 = vsub.f32 1.0, %v303
    %v305 = vmul.f32 %v304, -1e+09
    %v307 = vlaneseq
    %v308 = vshrl.u32 %v307, 7
    %v309 = vsub.s32 0, %v308
    %v310 = vrot.slane %v305, %v309
    %v312 = vadd.f32 %v295, %v310
    %v313 = vadd.f32 %v300, %v310
    %vm314 = vcmask 64512
    %v315 = vsel %vm314, %v312, -inf
    %316 = vmax.xlane.f32.xlu0 %v315
    %v317 = vpop.xlane.xlu0 %316
    %v318 = vsel %vm314, %v313, -inf
    %319 = vmax.xlane.f32.xlu0 %v318
    %v320 = vpop.xlane.xlu0 %319
    %v321 = vsub.f32 %v312, %v317
    %v322 = vsub.f32 %v313, %v320
    %v323 = vmul.f32 %v321, 1.442695
    %v324 = vpow.pop %v323
    %v325 = vmul.f32 %v322, 1.442695
    %v326 = vpow.pop %v325
    %v327 = vsel %vm314, %v324, 0.0
    %328 = vadd.xlane.f32.xlu0 %v327
    %v329 = vpop.xlane.xlu0 %328
    %v330 = vsel %vm314, %v326, 0.0
    %331 = vadd.xlane.f32.xlu0 %v330
    %v332 = vpop.xlane.xlu0 %331
    %v333 = vrcp.pop %v329
    %v334 = vrcp.pop %v332
    %v335 = vmul.f32 %v324, %v333
    %v336 = vmul.f32 %v326, %v334
    %337 = vst.msk [vmem:[#allocation14] sm:$0xff] %vm314, %v335
    %338 = vst.msk [vmem:[#allocation14 + $0x8] sm:$0xff] %vm314, %v336
    %v339 = vld [vmem:[#allocation2] sm:$0x1]
    %v340 = vsel %vm314, %v335, 0.0
    %v341 = vsel %vm314, %v336, 0.0
    %v342 = vadd.f32 %v340, %v341
    %v343 = vrot.slane %v342, 4
    %v344 = vadd.f32 %v342, %v343
    %v345 = vrot.slane %v344, 2
    %v346 = vadd.f32 %v344, %v345
    %v347 = vrot.slane %v346, 1
    %v348 = vadd.f32 %v346, %v347
    %v349 = vadd.f32 %v339, %v348
    %vm350 = vcmask 57344
    %351 = vst.msk [vmem:[#allocation2] sm:$0x1] %vm350, %v349
    %v352 = vlaneseq
    %v353 = vand.u32 %v352, 127
    %v354 = vlaneseq
    %v355 = vshrl.u32 %v354, 7
    %v356 = vsel %vm314, %v335, -inf
    %357 = vmax.xlane.f32.xlu0 %v356
    %v358 = vpop.xlane.xlu0 %357
    %v359 = vsel %vm314, %v336, -inf
    %360 = vmax.xlane.f32.xlu0 %v359
    %v361 = vpop.xlane.xlu0 %360
    %vm362 = vcmp.eq.f32.partialorder %v335, %v358
    %vm363 = vcmp.eq.f32.partialorder %v336, %v361
    %v364 = vsel %vm362, %v353, 8
    %v365 = vsel %vm363, %v353, 8
    %v366 = vsel %vm314, %v364, 2147483647
    %v367 = vand.u32 %v366, 65535
    %v368 = vshra.s32 %v366, 16
    %v369 = vcvt.s32.f32 %v367
    %v370 = vcvt.s32.f32 %v368
    %371 = vmin.xlane.f32.xlu0 %v370
    %v372 = vpop.xlane.xlu0 %371
    %vm373 = vcmp.eq.f32.partialorder %v370, %v372
    %v374 = vsel %vm373, %v369, inf
    %375 = vmin.xlane.f32.xlu0 %v374
    %v376 = vpop.xlane.xlu0 %375
    %v377 = vcvt.f32.s32 %v376
    %v378 = vcvt.f32.s32 %v372
    %v379 = vshll.u32 %v378, 16
    %v380 = vadd.s32 %v379, %v377
    %v381 = vsel %vm314, %v365, 2147483647
    %v382 = vand.u32 %v381, 65535
    %v383 = vshra.s32 %v381, 16
    %v384 = vcvt.s32.f32 %v382
    %v385 = vcvt.s32.f32 %v383
    %386 = vmin.xlane.f32.xlu0 %v385
    %v387 = vpop.xlane.xlu0 %386
    %vm388 = vcmp.eq.f32.partialorder %v385, %v387
    %v389 = vsel %vm388, %v384, inf
    %390 = vmin.xlane.f32.xlu0 %v389
    %v391 = vpop.xlane.xlu0 %390
    %v392 = vcvt.f32.s32 %v391
    %v393 = vcvt.f32.s32 %v387
    %v394 = vshll.u32 %v393, 16
    %v395 = vadd.s32 %v394, %v392
    %vm396 = vcmp.eq.s32.totalorder %v353, %v380
    %vm397 = vcmp.eq.s32.totalorder %v353, %v395
    %v398 = vsel %vm396, 1, 0
    %v399 = vsel %vm397, 1, 0
    %v400 = vcvt.s32.f32 %v398
    %v401 = vcvt.s32.f32 %v399
    %v402 = vsel %vm314, %v400, -inf
    %v403 = vsel %vm314, %v401, -inf
    %v404 = vmax.f32 %v402, %v403
    %v405 = vrot.slane %v404, 4
    %v406 = vmax.f32 %v404, %v405
    %v407 = vrot.slane %v406, 2
    %v408 = vmax.f32 %v406, %v407
    %v409 = vrot.slane %v408, 1
    %v410 = vmax.f32 %v408, %v409
    %vm411 = vcmp.eq.s32.totalorder %v355, 0
    %v412 = vsel %vm411, 1, 0
    %vm413 = vcmp.eq.s32.totalorder %v412, 1
    %v414 = vsel %vm413, %v410, 0.0
    %v415 = vadd.f32 %v414, 0.0
    %v416 = vsel %vm396, -inf, %v335
    %v417 = vsel %vm397, -inf, %v336
    %v418 = vsel %vm314, %v416, -inf
    %419 = vmax.xlane.f32.xlu0 %v418
    %v420 = vpop.xlane.xlu0 %419
    %v421 = vsel %vm314, %v417, -inf
    %422 = vmax.xlane.f32.xlu0 %v421
    %v423 = vpop.xlane.xlu0 %422
    %vm424 = vcmp.eq.f32.partialorder %v416, %v420
    %vm425 = vcmp.eq.f32.partialorder %v417, %v423
    %v426 = vsel %vm424, %v353, 8
    %v427 = vsel %vm425, %v353, 8
    %v428 = vsel %vm314, %v426, 2147483647
    %v429 = vand.u32 %v428, 65535
    %v430 = vshra.s32 %v428, 16
    %v431 = vcvt.s32.f32 %v429
    %v432 = vcvt.s32.f32 %v430
    %433 = vmin.xlane.f32.xlu0 %v432
    %v434 = vpop.xlane.xlu0 %433
    %vm435 = vcmp.eq.f32.partialorder %v432, %v434
    %v436 = vsel %vm435, %v431, inf
    %437 = vmin.xlane.f32.xlu0 %v436
    %v438 = vpop.xlane.xlu0 %437
    %v439 = vcvt.f32.s32 %v438
    %v440 = vcvt.f32.s32 %v434
    %v441 = vshll.u32 %v440, 16
    %v442 = vadd.s32 %v441, %v439
    %v443 = vsel %vm314, %v427, 2147483647
    %v444 = vand.u32 %v443, 65535
    %v445 = vshra.s32 %v443, 16
    %v446 = vcvt.s32.f32 %v444
    %v447 = vcvt.s32.f32 %v445
    %448 = vmin.xlane.f32.xlu0 %v447
    %v449 = vpop.xlane.xlu0 %448
    %vm450 = vcmp.eq.f32.partialorder %v447, %v449
    %v451 = vsel %vm450, %v446, inf
    %452 = vmin.xlane.f32.xlu0 %v451
    %v453 = vpop.xlane.xlu0 %452
    %v454 = vcvt.f32.s32 %v453
    %v455 = vcvt.f32.s32 %v449
    %v456 = vshll.u32 %v455, 16
    %v457 = vadd.s32 %v456, %v454
    %vm458 = vcmp.eq.s32.totalorder %v353, %v442
    %vm459 = vcmp.eq.s32.totalorder %v353, %v457
    %v460 = vsel %vm458, 1, 0
    %v461 = vsel %vm459, 1, 0
    %v462 = vcvt.s32.f32 %v460
    %v463 = vcvt.s32.f32 %v461
    %v464 = vsel %vm314, %v462, -inf
    %v465 = vsel %vm314, %v463, -inf
    %v466 = vmax.f32 %v464, %v465
    %v467 = vrot.slane %v466, 4
    %v468 = vmax.f32 %v466, %v467
    %v469 = vrot.slane %v468, 2
    %v470 = vmax.f32 %v468, %v469
    %v471 = vrot.slane %v470, 1
    %v472 = vmax.f32 %v470, %v471
    %vm473 = vcmp.eq.s32.totalorder %v355, 1
    %v474 = vsel %vm473, 1, 0
    %vm475 = vcmp.eq.s32.totalorder %v474, 1
    %v476 = vsel %vm475, %v472, 0.0
    %v477 = vadd.f32 %v415, %v476
    %v478 = vld [vmem:[#allocation15] sm:$0x3]
    %v479 = vmax.f32 %v478, %v477
    %vm480 = vcmask 58368
    %481 = vst.msk [vmem:[#allocation15] sm:$0x3] %vm480, %v479
    // Predicated region
    $region54: #{tpu_custom_call.1} parent=1 // pred_check
      %p482 = pneg %p104
    $region55: #{tpu_custom_call.1} parent=1 // pred_check_branch
      %484 = sbr.rel (%p482) target = $region57
    $region56: #{tpu_custom_call.1} parent=1 // pred_region
      %v485 = vld [vmem:[#allocation2] sm:$0x1]
      %v486 = vmul.f32 %v485, 0.0625
      %v487 = vmul.f32 %v486, 8.0
      %v488 = vadd.f32 %v487, 1e-09
      %v489 = vlog2.pop %v488
      %v490 = vmul.f32 %v489, 0.6931472
      %v491 = vmul.f32 %v486, %v490
      %v492 = vsel %vm350, %v491, 0.0
      %493 = vadd.xlane.f32.xlu0 %v492
      %v494 = vpop.xlane.xlu0 %493
      %v495 = vadd.f32 %v486, 1e-09
      %v496 = vlog2.pop %v495
      %v497 = vmul.f32 %v496, 0.6931472
      %v498 = vmul.f32 %v486, %v497
      %v499 = vsel %vm350, %v498, 0.0
      %500 = vadd.xlane.f32.xlu0 %v499
      %v501 = vpop.xlane.xlu0 %500
      %v502 = vsub.f32 0.0, %v501
      %v503 = vrcp.pop 2.0794415
      %v504 = vmul.f32 %v502, %v503
      %v505 = vmul.f32 %v504, 0.01
      %v506 = vsub.f32 %v494, %v505
      %vm507 = vcmask 0
      %508 = vst.msk [vmem:[#allocation17] sm:$0x1] %vm507, %v506
    $region57: #{tpu_custom_call.1} parent=1 // pred_fallthru
      _
    // Predicated region
    $region58: #{tpu_custom_call.1} parent=1 // pred_check
      _
    $region59: #{tpu_custom_call.1} parent=1 // pred_check_branch
      %510 = sbr.rel (0) target = $region61
    $region60: #{tpu_custom_call.1} parent=1 // pred_region
      %s512 = ssub.s32 256, 256
      %513 = vsyncadd [#allocation5], %s512
      %s514 = sshll.u32 [#allocation14], 4
      %s515 = int_to_ptr.vmem [resolvable:$true] %s514
      %520 = dma.vmem_to_hbm [thread:$0]  %s515, 256, %s6, [#allocation5], 128, 128, 8
    $region61: #{tpu_custom_call.1} parent=1 // pred_fallthru
      _
    // Predicated region
    $region62: #{tpu_custom_call.1} parent=1 // pred_check
      _
    $region63: #{tpu_custom_call.1} parent=1 // pred_check_branch
      %522 = sbr.rel (0) target = $region65
    $region64: #{tpu_custom_call.1} parent=1 // pred_region
      %s524 = ssub.s32 32, 32
      %525 = vsyncadd [#allocation16], %s524
      %s527 = sshll.u32 [#allocation15], 4
      %s528 = int_to_ptr.vmem [resolvable:$true] %s527
      %530 = dma.vmem_to_hbm [thread:$0]  %s528, 32, %s7, [#allocation16]
    $region65: #{tpu_custom_call.1} parent=1 // pred_fallthru
      _
    // Predicated region
    $region66: #{tpu_custom_call.1} parent=1 // pred_check
      _
    $region67: #{tpu_custom_call.1} parent=1 // pred_check_branch
      %532 = sbr.rel (0) target = $region69
    $region68: #{tpu_custom_call.1} parent=1 // pred_region
      %s534 = ssub.s32 16, 16
      %535 = vsyncadd [#allocation16], %s534
      %s537 = sshll.u32 [#allocation17], 4
      %s538 = int_to_ptr.vmem [resolvable:$true] %s537
      %540 = dma.vmem_to_hbm [thread:$0]  %s538, 16, %s8, [#allocation16]
    $region69: #{tpu_custom_call.1} parent=1 // pred_fallthru
      _
    // Predicated region
    $region70: #{tpu_custom_call.1} parent=1 // pred_check
      _
    $region71: #{tpu_custom_call.1} parent=1 // pred_check_branch
      %542 = sbr.rel (0) target = $region73
    $region72: #{tpu_custom_call.1} parent=1 // pred_region
      %543 = dma.done [#allocation5], 256
    $region73: #{tpu_custom_call.1} parent=1 // pred_fallthru
      _
    // Predicated region
    $region74: #{tpu_custom_call.1} parent=1 // pred_check
      _
    $region75: #{tpu_custom_call.1} parent=1 // pred_check_branch
      %545 = sbr.rel (0) target = $region77
    $region76: #{tpu_custom_call.1} parent=1 // pred_region
      %546 = dma.done [#allocation16], 32
    $region77: #{tpu_custom_call.1} parent=1 // pred_fallthru
      _
    // Predicated region
    $region78: #{tpu_custom_call.1} parent=1 // pred_check
      _
    $region79: #{tpu_custom_call.1} parent=1 // pred_check_branch
      %548 = sbr.rel (0) target = $region81
    $region80: #{tpu_custom_call.1} parent=1 // pred_region
      %549 = dma.done [#allocation16], 16
    $region81: #{tpu_custom_call.1} parent=1 // pred_fallthru
      _
    %550 = vsyncpa [#allocation4], 1
    %551 = vsyncpa [#allocation7], 1
    %552 = vsyncpa [#allocation10], 1
    %553 = vsyncpa [#allocation13], 1
    %554 = vsyncpa [#allocation5], 1
    %555 = vsyncpa [#allocation16], 1

</llo_original>
